<compile_context>
chip_gen: v7x
topology: tpu7x:2x2x1
jax: 0.10.0
libtpu: 0.0.40
codegen_flags: <defaults>
</compile_context>

<pallas_src>
import functools

import jax
import jax.numpy as jnp
from jax.experimental import pallas as pl
from jax.experimental.pallas import tpu as pltpu


def _cdiv(a, b):
    return -(-a // b)


# Sublane packing (rows per 32-bit vreg row) by itemsize: channel offsets that
# are multiples of this keep each per-input slab store unmasked.
_SUBLANE_PACK = {4: 8, 2: 16, 1: 32}


@functools.lru_cache(maxsize=1)
def _vmem_config():
    """Generation-aware VMEM budget.

    Returns (live_tile_budget_bytes, vmem_limit_bytes).  The live budget
    counts the double-buffered input tiles plus output tile resident at once.
      128 MiB parts (v5e/v6e): 24 MiB live / 64 MiB scoped limit.
       64 MiB parts (v7x/TC):  16 MiB live / 32 MiB scoped limit.
    """
    try:
        cap = int(pltpu.get_tpu_info().vmem_capacity_bytes)
    except Exception:
        cap = 64 << 20  # conservative default (v7x per-TensorCore VMEM)
    budget = max(8 << 20, min(cap // 4, 24 << 20))
    limit = max(2 * budget, min(cap // 2, 64 << 20))
    return budget, limit


def _choose_tiles(n, hw, total_c, itemsize, budget, min_steps=8):
    """Pick (tn, thw) block sizes: lane-dense spatial tile, enough grid steps."""

    def live_bytes(tn_, thw_):
        # 2 (double buffer) * (sum_i C_i inputs + total_c output) * tile elems.
        return 4 * total_c * tn_ * thw_ * itemsize

    # Lane-dense spatial tile: multiple of 128, or full extent when hw < 128.
    if hw <= 128:
        thw = hw
        min_thw = hw
    else:
        min_thw = 128
        thw = min((hw // 128) * 128, 2048)
        while thw > 128 and live_bytes(1, thw) > budget:
            thw -= 128

    # Batch tile: largest that still fits the live-tile budget.
    per_tn = max(1, live_bytes(1, thw))
    tn = max(1, min(n, budget // per_tn))

    # Degenerate-grid guard: shrink tiles until there are enough steps for
    # pipelining (and for both v7x TensorCores on the "parallel" axes).
    def steps(tn_, thw_):
        return _cdiv(n, tn_) * _cdiv(hw, thw_)

    max_steps = n * _cdiv(hw, min_thw)
    target = min(min_steps, max_steps)
    while steps(tn, thw) < target and tn > 1:
        tn = max(1, tn // 2)
    while steps(tn, thw) < target and thw > min_thw:
        thw = max(min_thw, ((thw // 2) // 128) * 128)

    return tn, thw


@functools.lru_cache(maxsize=None)
def make_weighted_concat(channels, n, hw, dtype_name, vmem_budget, vmem_limit):
    """Builds a cached pallas_call for WeightedConcat over len(channels) inputs."""
    dtype = jnp.dtype(dtype_name)
    k = len(channels)

    offsets = [0]
    for c in channels:
        offsets.append(offsets[-1] + c)
    total_c = offsets[-1]

    tn, thw = _choose_tiles(n, hw, total_c, dtype.itemsize, vmem_budget)
    grid = (_cdiv(n, tn), _cdiv(hw, thw))

    pack = _SUBLANE_PACK.get(dtype.itemsize, 8)
    aligned = all(off % pack == 0 for off in offsets[:-1])

    def kernel(w_ref, *refs):
        # refs = (x_0, ..., x_{k-1}, out); x_i block is (tn, C_i, thw), the
        # out block is (tn, total_c, thw).  Loop unrolled at trace time.
        x_refs = refs[:k]
        o_ref = refs[k]
        if aligned:
            # Every channel boundary is sublane-pack aligned: per-input slab
            # stores are unmasked (lane axis is already 128-dense).
            for i in range(k):
                w = w_ref[i]  # scalar read from SMEM
                o_ref[:, offsets[i]:offsets[i + 1], :] = (
                    x_refs[i][...] * w).astype(o_ref.dtype)
        else:
            # Unaligned boundaries: assemble the block in registers and do a
            # single full-block store; shuffles stay off the store slot.
            parts = [(x_refs[i][...] * w_ref[i]).astype(o_ref.dtype)
                     for i in range(k)]
            o_ref[...] = jnp.concatenate(parts, axis=1)

    in_specs = [pl.BlockSpec(memory_space=pltpu.MemorySpace.SMEM)]  # weights
    in_specs += [
        pl.BlockSpec((tn, channels[i], thw), lambda b, s: (b, 0, s))
        for i in range(k)
    ]
    out_spec = pl.BlockSpec((tn, total_c, thw), lambda b, s: (b, 0, s))

    live = 4 * total_c * tn * thw * dtype.itemsize
    call = pl.pallas_call(
        kernel,
        out_shape=jax.ShapeDtypeStruct((n, total_c, hw), dtype),
        grid=grid,
        in_specs=in_specs,
        out_specs=out_spec,
        compiler_params=pltpu.CompilerParams(
            # Pure elementwise scale+copy: both axes independent -> let v7x
            # shard them across its two TensorCores (harmless on v5e/v6e).
            dimension_semantics=("parallel", "parallel"),
            # Always covers the chosen tile's double-buffered footprint.
            vmem_limit_bytes=max(vmem_limit, live + (4 << 20)),
        ),
    )

    def fn(weights, *xs):
        assert len(xs) == k
        return call(weights, *xs)

    return fn


def weighted_concat_nchw(weights, inputs):
    """Wrapper taking NCHW inputs (like the torch module), returns NCHW output."""
    n, _, h, w = inputs[0].shape
    hw = h * w
    channels = tuple(int(x.shape[1]) for x in inputs)
    flat_inputs = [x.reshape(x.shape[0], x.shape[1], hw) for x in inputs]
    budget, limit = _vmem_config()  # chip-aware; part of the build-cache key
    fn = make_weighted_concat(channels, n, hw,
                              jnp.dtype(inputs[0].dtype).name, budget, limit)
    out_flat = fn(weights, *flat_inputs)
    return out_flat.reshape(n, sum(channels), h, w)


if __name__ == "__main__":
    key = jax.random.PRNGKey(0)

    # Small shapes consistent with the module: 3 inputs, NCHW.
    num_inputs = 3
    N, H, W = 2, 16, 16
    channels = (8, 16, 8)  # torch.cat(dim=1) allows differing channel counts

    keys = jax.random.split(key, num_inputs + 1)
    inputs = [
        jax.random.normal(keys[i], (N, channels[i], H, W), dtype=jnp.float32)
        for i in range(num_inputs)
    ]

    # nn.Parameter(torch.ones(num_inputs)); distinct values here to actually
    # exercise the per-input weighting path.
    weights = jnp.array([1.0, 0.5, -2.0], dtype=jnp.float32)

    out = weighted_concat_nchw(weights, inputs)
    out = jax.block_until_ready(out)

    # Pure-JAX reference for correctness.
    ref = jnp.concatenate([weights[i] * inputs[i] for i in range(num_inputs)],
                          axis=1)
    assert out.shape == (N, sum(channels), H, W)
    assert jnp.allclose(out, ref, atol=1e-6, rtol=1e-6)

    print("KERNEL_OK")
</pallas_src>

<mosaic_0001>
module attributes {stable_mosaic.version = 11 : i64} {
  func.func @kernel(%arg0: i32, %arg1: i32, %arg2: memref<3xf32, #tpu.memory_space<smem>>, %arg3: memref<1x8x128xf32, #tpu.memory_space<vmem>>, %arg4: memref<1x16x128xf32, #tpu.memory_space<vmem>>, %arg5: memref<1x8x128xf32, #tpu.memory_space<vmem>>, %arg6: memref<1x32x128xf32, #tpu.memory_space<vmem>>) attributes {dimension_semantics = [#tpu.dimension_semantics<parallel>, #tpu.dimension_semantics<parallel>], iteration_bounds = array<i64: 2, 2>, scalar_prefetch = 0 : i64, scratch_operands = 0 : i64, tpu.core_type = #tpu.core_type<tc>, window_params = [{transform_indices = @transform_0, window_bounds = array<i64: 3>}, {transform_indices = @transform_1, window_bounds = array<i64: 1, 8, 128>}, {transform_indices = @transform_2, window_bounds = array<i64: 1, 16, 128>}, {transform_indices = @transform_3, window_bounds = array<i64: 1, 8, 128>}, {transform_indices = @transform_4, window_bounds = array<i64: 1, 32, 128>}]} {
    %c0 = arith.constant 0 : index
    %0 = memref.load %arg2[%c0] : memref<3xf32, #tpu.memory_space<smem>>
    %c0_0 = arith.constant 0 : index
    %c0_1 = arith.constant 0 : index
    %c0_2 = arith.constant 0 : index
    %1 = vector.load %arg3[%c0_0, %c0_1, %c0_2] : memref<1x8x128xf32, #tpu.memory_space<vmem>>, vector<1x8x128xf32>
    %2 = vector.broadcast %0 : f32 to vector<1x8x128xf32>
    %3 = arith.mulf %1, %2 : vector<1x8x128xf32>
    %c0_3 = arith.constant 0 : index
    %c0_4 = arith.constant 0 : index
    %c0_5 = arith.constant 0 : index
    %4 = vector.load %arg6[%c0_3, %c0_4, %c0_5] : memref<1x32x128xf32, #tpu.memory_space<vmem>>, vector<1x8x128xf32>
    tpu.vector_store %arg6[%c0_3, %c0_4, %c0_5], %3 {strides = array<i32>} : memref<1x32x128xf32, #tpu.memory_space<vmem>>, vector<1x8x128xf32>,
    %c1 = arith.constant 1 : index
    %5 = memref.load %arg2[%c1] : memref<3xf32, #tpu.memory_space<smem>>
    %c0_6 = arith.constant 0 : index
    %c0_7 = arith.constant 0 : index
    %c0_8 = arith.constant 0 : index
    %6 = vector.load %arg4[%c0_6, %c0_7, %c0_8] : memref<1x16x128xf32, #tpu.memory_space<vmem>>, vector<1x16x128xf32>
    %7 = vector.broadcast %5 : f32 to vector<1x16x128xf32>
    %8 = arith.mulf %6, %7 : vector<1x16x128xf32>
    %c0_9 = arith.constant 0 : index
    %c8 = arith.constant 8 : index
    %c0_10 = arith.constant 0 : index
    %9 = vector.load %arg6[%c0_9, %c8, %c0_10] : memref<1x32x128xf32, #tpu.memory_space<vmem>>, vector<1x16x128xf32>
    tpu.vector_store %arg6[%c0_9, %c8, %c0_10], %8 {strides = array<i32>} : memref<1x32x128xf32, #tpu.memory_space<vmem>>, vector<1x16x128xf32>,
    %c2 = arith.constant 2 : index
    %10 = memref.load %arg2[%c2] : memref<3xf32, #tpu.memory_space<smem>>
    %c0_11 = arith.constant 0 : index
    %c0_12 = arith.constant 0 : index
    %c0_13 = arith.constant 0 : index
    %11 = vector.load %arg5[%c0_11, %c0_12, %c0_13] : memref<1x8x128xf32, #tpu.memory_space<vmem>>, vector<1x8x128xf32>
    %12 = vector.broadcast %10 : f32 to vector<1x8x128xf32>
    %13 = arith.mulf %11, %12 : vector<1x8x128xf32>
    %c0_14 = arith.constant 0 : index
    %c24 = arith.constant 24 : index
    %c0_15 = arith.constant 0 : index
    %14 = vector.load %arg6[%c0_14, %c24, %c0_15] : memref<1x32x128xf32, #tpu.memory_space<vmem>>, vector<1x8x128xf32>
    tpu.vector_store %arg6[%c0_14, %c24, %c0_15], %13 {strides = array<i32>} : memref<1x32x128xf32, #tpu.memory_space<vmem>>, vector<1x8x128xf32>,
    return
  }
  func.func @transform_0(%arg0: i32, %arg1: i32) -> i32 {
    %c0_i32 = arith.constant 0 : i32
    %c0_i32_0 = arith.constant 0 : i32
    return %c0_i32 : i32
  }
  func.func @transform_1(%arg0: i32, %arg1: i32) -> (i32, i32, i32) {
    %c0_i32 = arith.constant 0 : i32
    %c0_i32_0 = arith.constant 0 : i32
    return %arg0, %c0_i32, %arg1 : i32, i32, i32
  }
  func.func @transform_2(%arg0: i32, %arg1: i32) -> (i32, i32, i32) {
    %c0_i32 = arith.constant 0 : i32
    %c0_i32_0 = arith.constant 0 : i32
    return %arg0, %c0_i32, %arg1 : i32, i32, i32
  }
  func.func @transform_3(%arg0: i32, %arg1: i32) -> (i32, i32, i32) {
    %c0_i32 = arith.constant 0 : i32
    %c0_i32_0 = arith.constant 0 : i32
    return %arg0, %c0_i32, %arg1 : i32, i32, i32
  }
  func.func @transform_4(%arg0: i32, %arg1: i32) -> (i32, i32, i32) {
    %c0_i32 = arith.constant 0 : i32
    %c0_i32_0 = arith.constant 0 : i32
    return %arg0, %c0_i32, %arg1 : i32, i32, i32
  }
}

</mosaic_0001>

<llo_original>
// kernel: tpu_custom_call.1
$region0: #{tpu_custom_call.1}
  #allocation0 [shape = 'u32[]', space=smem, size = 0x4, offset = 0x4, fixed_abs, tag = 'smem constant byte address 0x4 - core index']
  #allocation1 [shape = 'u32[144,128]{1,0:T(1,128)}', space=vmem, size = 0x12000, scoped, tag = 'internal scratch']
  %s0 = inlined_call_operand.hbm [shape: f32[3], index: 0, kind: input, shape index: {}]
  %s1 = inlined_call_operand.hbm [shape: f32[2,8,256], index: 1, kind: input, shape index: {}]
  %s2 = inlined_call_operand.hbm [shape: f32[2,16,256], index: 2, kind: input, shape index: {}]
  %s3 = inlined_call_operand.hbm [shape: f32[2,8,256], index: 3, kind: input, shape index: {}]
  %s4 = inlined_call_operand.hbm [shape: f32[2,32,256], index: 4, kind: output, shape index: {}]
  %s5 = sld [smem:[#allocation0]]
  $region65: #{tpu_custom_call.1} parent=0
    _
  %s7 = ssub.s32 1, %s5
  %s8 = scalar_select 0, %s7, %s5
  $region1: #{tpu_custom_call.1} parent=0
    #allocation2 [shape = 'u8[512]{0}', space=smem, size = 0x200, scoped, tag = 'input window, operand 0, single buffered']
    #allocation3 [shape = 's32[2]{0}', space=sflag, size = 0x8, scoped, tag = 'scoped memory for tpu_custom_call.1']
    #allocation4 [shape = 's32[2]{0}', space=sflag, size = 0x8, scoped, tag = 'scoped memory for tpu_custom_call.1']
    #allocation5 [shape = 's32[2]{0}', space=sflag, size = 0x8, scoped, tag = 'scoped memory for tpu_custom_call.1']
    #allocation6 [shape = 'u8[8192]{0}', space=vmem, size = 0x2000, scoped, tag = 'input window, operand 1']
    #allocation7 [shape = 'u8[16384]{0}', space=vmem, size = 0x4000, scoped, tag = 'input window, operand 2']
    #allocation8 [shape = 's32[2]{0}', space=sflag, size = 0x8, scoped, tag = 'scoped memory for tpu_custom_call.1']
    #allocation9 [shape = 'u8[8192]{0}', space=vmem, size = 0x2000, scoped, tag = 'input window, operand 3']
    #allocation10 [shape = 'u8[32768]{0}', space=vmem, size = 0x8000, scoped, tag = 'output window, operand 0']
    %9 = vsyncpa [#allocation5], 0
    %10 = vsyncpa [#allocation3], 0
    %s11 = scalar_lea.sflag [#allocation3], 1
    %12 = vsyncpa %s11, 0
    %13 = vsyncpa [#allocation8], 0
    %s14 = scalar_lea.sflag [#allocation8], 1
    %15 = vsyncpa %s14, 0
    %16 = vsyncpa [#allocation4], 0
    %s17 = scalar_lea.sflag [#allocation4], 1
    %18 = vsyncpa %s17, 0
    loop: start=0, step=1, limit=6
    $region2: #{tpu_custom_call.1} parent=1 // loop_pre_header
      _
    $region3: #{tpu_custom_call.1} parent=1 // loop_header
      %s20 = sphi 0, %s24
      %p21 = scmp.ge.s32.totalorder %s20, 6
      %s27 = sphi 0, %s39
      %s28 = sphi 0, %s35
      %s29 = sphi 0, %s27
      %s30 = sphi 0, %s28
      %s31 = sphi 0, %s29
      %s32 = sphi 0, %s30
      %s40 = sphi 0, %s40
      %s42 = sphi 0, %s40
      %s43 = sphi 0, %s42
      %s57 = sphi 0, %s43
      %s65 = sphi 0, %s67
      %s68 = sphi 0, %s65
      %s69 = sphi 0, %s68
      %s85 = sphi 0, %s69
      %s93 = sphi 0, %s95
      %s96 = sphi 0, %s93
      %s97 = sphi 0, %s96
      %s113 = sphi 0, %s97
      %s121 = sphi 0, %s123
      %s124 = sphi 0, %s121
      %s125 = sphi 0, %s124
      %s141 = sphi 0, %s125
      %s149 = sphi 0, %s151
      %s152 = sphi 0, %s149
      %s153 = sphi 0, %s152
      %s169 = sphi 0, %s153
    $region4: #{tpu_custom_call.1} parent=1 // loop_header_branch
      %23 = sbr.rel (%p21) target = $region8
    $region5: #{tpu_custom_call.1} parent=1 // loop_body
      %s25 = ssub.s32 %s20, 1
      %s26 = ssub.s32 %s20, 2
      %s33 = sadd.s32 1, %s28
      %p34 = scmp.ge.s32.totalorder %s33, 2
      %s35 = scalar_select %p34, 0, %s33
      %s36 = sadd.s32 1, %s27
      %s37 = scalar_select %p34, %s36, %s27
      %p38 = scmp.ge.s32.totalorder %s37, 2
      %s39 = scalar_select %p38, 0, %s37
      %s41 = sadd.s32 %s40, 1
      %p44 = scmp.eq.s32.totalorder %s20, 3
      %p45 = scmp.ne.s32.totalorder %s40, %s42
      %p46 = scmp.eq.s32.totalorder %s20, 0
      %p47 = por %p45, %p46
      %p48 = scmp.ne.s32.totalorder %s40, %s42
      %p49 = scmp.eq.s32.totalorder %s25, 3
      %p50 = por %p48, %p49
      %p51 = scmp.ne.s32.totalorder %s42, %s43
      %p52 = scmp.eq.s32.totalorder %s25, 0
      %p53 = por %p51, %p52
      %p54 = scmp.ne.s32.totalorder %s42, %s43
      %p55 = scmp.eq.s32.totalorder %s26, 3
      %p56 = por %p54, %p55
      %p58 = scmp.ne.s32.totalorder %s43, %s57
      %p59 = scmp.eq.s32.totalorder %s26, 0
      %p60 = por %p58, %p59
      %s61 = ssub.s32 %s27, %s39
      %s62 = ssub.s32 %s28, %s35
      %s63 = sor.u32 %s61, %s62
      %p64 = scmp.eq.s32.totalorder %s63, 0
      %s66 = sadd.s32 %s65, 1
      %s67 = scalar_select %p64, %s65, %s66
      %p70 = pneg %p64
      %p71 = scmp.eq.s32.totalorder %s20, 3
      %p72 = por %p70, %p71
      %p73 = scmp.ne.s32.totalorder %s65, %s68
      %p74 = scmp.eq.s32.totalorder %s20, 0
      %p75 = por %p73, %p74
      %p76 = scmp.ne.s32.totalorder %s65, %s68
      %p77 = scmp.eq.s32.totalorder %s25, 3
      %p78 = por %p76, %p77
      %p79 = scmp.ne.s32.totalorder %s68, %s69
      %p80 = scmp.eq.s32.totalorder %s25, 0
      %p81 = por %p79, %p80
      %p82 = scmp.ne.s32.totalorder %s68, %s69
      %p83 = scmp.eq.s32.totalorder %s26, 3
      %p84 = por %p82, %p83
      %p86 = scmp.ne.s32.totalorder %s69, %s85
      %p87 = scmp.eq.s32.totalorder %s26, 0
      %p88 = por %p86, %p87
      %s89 = ssub.s32 %s27, %s39
      %s90 = ssub.s32 %s28, %s35
      %s91 = sor.u32 %s89, %s90
      %p92 = scmp.eq.s32.totalorder %s91, 0
      %s94 = sadd.s32 %s93, 1
      %s95 = scalar_select %p92, %s93, %s94
      %p98 = pneg %p92
      %p99 = scmp.eq.s32.totalorder %s20, 3
      %p100 = por %p98, %p99
      %p101 = scmp.ne.s32.totalorder %s93, %s96
      %p102 = scmp.eq.s32.totalorder %s20, 0
      %p103 = por %p101, %p102
      %p104 = scmp.ne.s32.totalorder %s93, %s96
      %p105 = scmp.eq.s32.totalorder %s25, 3
      %p106 = por %p104, %p105
      %p107 = scmp.ne.s32.totalorder %s96, %s97
      %p108 = scmp.eq.s32.totalorder %s25, 0
      %p109 = por %p107, %p108
      %p110 = scmp.ne.s32.totalorder %s96, %s97
      %p111 = scmp.eq.s32.totalorder %s26, 3
      %p112 = por %p110, %p111
      %p114 = scmp.ne.s32.totalorder %s97, %s113
      %p115 = scmp.eq.s32.totalorder %s26, 0
      %p116 = por %p114, %p115
      %s117 = ssub.s32 %s27, %s39
      %s118 = ssub.s32 %s28, %s35
      %s119 = sor.u32 %s117, %s118
      %p120 = scmp.eq.s32.totalorder %s119, 0
      %s122 = sadd.s32 %s121, 1
      %s123 = scalar_select %p120, %s121, %s122
      %p126 = pneg %p120
      %p127 = scmp.eq.s32.totalorder %s20, 3
      %p128 = por %p126, %p127
      %p129 = scmp.ne.s32.totalorder %s121, %s124
      %p130 = scmp.eq.s32.totalorder %s20, 0
      %p131 = por %p129, %p130
      %p132 = scmp.ne.s32.totalorder %s121, %s124
      %p133 = scmp.eq.s32.totalorder %s25, 3
      %p134 = por %p132, %p133
      %p135 = scmp.ne.s32.totalorder %s124, %s125
      %p136 = scmp.eq.s32.totalorder %s25, 0
      %p137 = por %p135, %p136
      %p138 = scmp.ne.s32.totalorder %s124, %s125
      %p139 = scmp.eq.s32.totalorder %s26, 3
      %p140 = por %p138, %p139
      %p142 = scmp.ne.s32.totalorder %s125, %s141
      %p143 = scmp.eq.s32.totalorder %s26, 0
      %p144 = por %p142, %p143
      %s145 = ssub.s32 %s27, %s39
      %s146 = ssub.s32 %s28, %s35
      %s147 = sor.u32 %s145, %s146
      %p148 = scmp.eq.s32.totalorder %s147, 0
      %s150 = sadd.s32 %s149, 1
      %s151 = scalar_select %p148, %s149, %s150
      %p154 = pneg %p148
      %p155 = scmp.eq.s32.totalorder %s20, 3
      %p156 = por %p154, %p155
      %p157 = scmp.ne.s32.totalorder %s149, %s152
      %p158 = scmp.eq.s32.totalorder %s20, 0
      %p159 = por %p157, %p158
      %p160 = scmp.ne.s32.totalorder %s149, %s152
      %p161 = scmp.eq.s32.totalorder %s25, 3
      %p162 = por %p160, %p161
      %p163 = scmp.ne.s32.totalorder %s152, %s153
      %p164 = scmp.eq.s32.totalorder %s25, 0
      %p165 = por %p163, %p164
      %p166 = scmp.ne.s32.totalorder %s152, %s153
      %p167 = scmp.eq.s32.totalorder %s26, 3
      %p168 = por %p166, %p167
      %p170 = scmp.ne.s32.totalorder %s153, %s169
      %p171 = scmp.eq.s32.totalorder %s26, 0
      %p172 = por %p170, %p171
      %p173 = scmp.le.s32.totalorder 1, %s20
      %p174 = scmp.lt.s32.totalorder %s20, 5
      %p175 = pnand %p173, %p174
      %p176 = pneg %p175
      // Predicated region
      $region9: #{tpu_custom_call.1} parent=5 // pred_check
        _
      $region10: #{tpu_custom_call.1} parent=5 // pred_check_branch
        %178 = sbr.rel (%p175) target = $region12
      $region11: #{tpu_custom_call.1} parent=5 // pred_region
        %s179 = ssub.s32 %s20, 1
        // Predicated region
        $region13: #{tpu_custom_call.1} parent=11 // pred_check
          %p180 = pneg %p53
        $region14: #{tpu_custom_call.1} parent=11 // pred_check_branch
          %182 = sbr.rel (%p180) target = $region16
        $region15: #{tpu_custom_call.1} parent=11 // pred_region
          %s184 = ssub.s32 16, 16
          %185 = vsyncadd [#allocation5], %s184
          %188 = dma.hbm_to_smem %s0, 16, [#allocation2], [#allocation5]
        $region16: #{tpu_custom_call.1} parent=11 // pred_fallthru
          _
      $region12: #{tpu_custom_call.1} parent=5 // pred_fallthru
        _
      %p189 = scmp.lt.s32.totalorder %s20, 4
      // Predicated region
      $region17: #{tpu_custom_call.1} parent=5 // pred_check
        %p190 = pneg %p189
      $region18: #{tpu_custom_call.1} parent=5 // pred_check_branch
        %192 = sbr.rel (%p190) target = $region20
      $region19: #{tpu_custom_call.1} parent=5 // pred_region
        // Predicated region
        $region21: #{tpu_custom_call.1} parent=19 // pred_check
          %p193 = pneg %p75
        $region22: #{tpu_custom_call.1} parent=19 // pred_check_branch
          %195 = sbr.rel (%p193) target = $region24
        $region23: #{tpu_custom_call.1} parent=19 // pred_region
          %s196 = sand.u32 %s65, 1
          %s197 = scalar_lea.sflag [#allocation3], %s196
          %s198 = sand.u32 %s65, 1
          %s199 = smul.addr %s198, 8
          %s200 = scalar_lea.vmem [#allocation6], %s199
          %s202 = ssub.s32 128, 128
          %203 = vsyncadd %s197, %s202
          %s204 = smul.addr %s27, 2
          %s205 = sadd.s32 %s28, %s204
          %s206 = smul.addr %s205, 128
          %s207 = scalar_lea.hbm %s1, %s206
          %s209 = sshll.u32 %s200, 4
          %s210 = int_to_ptr.vmem [resolvable:$true] %s209
          %212 = dma.hbm_to_vmem [thread:$0]  %s207, 128, %s210, %s197
        $region24: #{tpu_custom_call.1} parent=19 // pred_fallthru
          _
        // Predicated region
        $region25: #{tpu_custom_call.1} parent=19 // pred_check
          %p213 = pneg %p103
        $region26: #{tpu_custom_call.1} parent=19 // pred_check_branch
          %215 = sbr.rel (%p213) target = $region28
        $region27: #{tpu_custom_call.1} parent=19 // pred_region
          %s216 = sand.u32 %s20, 1
          %s217 = scalar_lea.sflag [#allocation8], %s216
          %s218 = sand.u32 %s93, 1
          %s219 = smul.addr %s218, 16
          %s220 = scalar_lea.vmem [#allocation7], %s219
          %s222 = ssub.s32 256, 256
          %223 = vsyncadd %s217, %s222
          %s224 = smul.addr %s27, 4
          %s225 = sadd.s32 %s28, %s224
          %s226 = smul.addr %s225, 128
          %s227 = scalar_lea.hbm %s2, %s226
          %s228 = sshll.u32 %s220, 4
          %s229 = int_to_ptr.vmem [resolvable:$true] %s228
          %234 = dma.hbm_to_vmem [thread:$0]  %s227, 256, %s229, %s217, 256, 128, 8
        $region28: #{tpu_custom_call.1} parent=19 // pred_fallthru
          _
        // Predicated region
        $region29: #{tpu_custom_call.1} parent=19 // pred_check
          %p235 = pneg %p131
        $region30: #{tpu_custom_call.1} parent=19 // pred_check_branch
          %237 = sbr.rel (%p235) target = $region32
        $region31: #{tpu_custom_call.1} parent=19 // pred_region
          %s238 = sand.u32 %s20, 1
          %s239 = scalar_lea.sflag [#allocation8], %s238
          %s240 = sand.u32 %s121, 1
          %s241 = smul.addr %s240, 8
          %s242 = scalar_lea.vmem [#allocation9], %s241
          %s244 = ssub.s32 128, 128
          %245 = vsyncadd %s239, %s244
          %s246 = smul.addr %s27, 2
          %s247 = sadd.s32 %s28, %s246
          %s248 = smul.addr %s247, 128
          %s249 = scalar_lea.hbm %s3, %s248
          %s251 = sshll.u32 %s242, 4
          %s252 = int_to_ptr.vmem [resolvable:$true] %s251
          %254 = dma.hbm_to_vmem [thread:$0]  %s249, 128, %s252, %s239
        $region32: #{tpu_custom_call.1} parent=19 // pred_fallthru
          _
      $region20: #{tpu_custom_call.1} parent=5 // pred_fallthru
        _
      %p255 = scmp.le.s32.totalorder 1, %s20
      %p256 = scmp.lt.s32.totalorder %s20, 5
      %p257 = pnand %p255, %p256
      %p258 = pneg %p257
      // Predicated region
      $region33: #{tpu_custom_call.1} parent=5 // pred_check
        _
      $region34: #{tpu_custom_call.1} parent=5 // pred_check_branch
        %260 = sbr.rel (%p257) target = $region36
      $region35: #{tpu_custom_call.1} parent=5 // pred_region
        %s261 = ssub.s32 %s20, 1
        // Predicated region
        $region37: #{tpu_custom_call.1} parent=35 // pred_check
          %p262 = pneg %p53
        $region38: #{tpu_custom_call.1} parent=35 // pred_check_branch
          %264 = sbr.rel (%p262) target = $region40
        $region39: #{tpu_custom_call.1} parent=35 // pred_region
          %265 = dma.done [#allocation5], 16
        $region40: #{tpu_custom_call.1} parent=35 // pred_fallthru
          _
        %s266 = sand.u32 %s68, 1
        %s267 = scalar_lea.sflag [#allocation3], %s266
        %s268 = sand.u32 %s68, 1
        %s269 = smul.addr %s268, 8
        %s270 = scalar_lea.vmem [#allocation6], %s269
        // Predicated region
        $region41: #{tpu_custom_call.1} parent=35 // pred_check
          %p271 = pneg %p81
        $region42: #{tpu_custom_call.1} parent=35 // pred_check_branch
          %273 = sbr.rel (%p271) target = $region44
        $region43: #{tpu_custom_call.1} parent=35 // pred_region
          %274 = dma.done %s267, 128
        $region44: #{tpu_custom_call.1} parent=35 // pred_fallthru
          _
        %s275 = sand.u32 %s25, 1
        %s276 = scalar_lea.sflag [#allocation8], %s275
        %s277 = sand.u32 %s96, 1
        %s278 = smul.addr %s277, 16
        %s279 = scalar_lea.vmem [#allocation7], %s278
        // Predicated region
        $region45: #{tpu_custom_call.1} parent=35 // pred_check
          %p280 = pneg %p109
        $region46: #{tpu_custom_call.1} parent=35 // pred_check_branch
          %282 = sbr.rel (%p280) target = $region48
        $region47: #{tpu_custom_call.1} parent=35 // pred_region
          %283 = dma.done %s276, 256
        $region48: #{tpu_custom_call.1} parent=35 // pred_fallthru
          _
        %s284 = sand.u32 %s25, 1
        %s285 = scalar_lea.sflag [#allocation8], %s284
        %s286 = sand.u32 %s124, 1
        %s287 = smul.addr %s286, 8
        %s288 = scalar_lea.vmem [#allocation9], %s287
        // Predicated region
        $region49: #{tpu_custom_call.1} parent=35 // pred_check
          %p289 = pneg %p137
        $region50: #{tpu_custom_call.1} parent=35 // pred_check_branch
          %291 = sbr.rel (%p289) target = $region52
        $region51: #{tpu_custom_call.1} parent=35 // pred_region
          %292 = dma.done %s285, 128
        $region52: #{tpu_custom_call.1} parent=35 // pred_fallthru
          _
        %293 = sfence
        %p294 = pneg %p53
        %p295 = pneg %p50
        %s296 = sand.u32 %s68, 1
        %s297 = scalar_lea.sflag [#allocation3], %s296
        %s298 = sand.u32 %s68, 1
        %s299 = smul.addr %s298, 8
        %s300 = scalar_lea.vmem [#allocation6], %s299
        %p301 = pneg %p81
        %p302 = pneg %p78
        %s303 = sand.u32 %s25, 1
        %s304 = scalar_lea.sflag [#allocation8], %s303
        %s305 = sand.u32 %s96, 1
        %s306 = smul.addr %s305, 16
        %s307 = scalar_lea.vmem [#allocation7], %s306
        %p308 = pneg %p109
        %p309 = pneg %p106
        %s310 = sand.u32 %s25, 1
        %s311 = scalar_lea.sflag [#allocation8], %s310
        %s312 = sand.u32 %s124, 1
        %s313 = smul.addr %s312, 8
        %s314 = scalar_lea.vmem [#allocation9], %s313
        %p315 = pneg %p137
        %p316 = pneg %p134
        %p317 = pneg %p165
        %p318 = pneg %p162
        %s319 = sand.u32 %s152, 1
        %s320 = scalar_lea.sflag [#allocation4], %s319
        %s321 = sand.u32 %s152, 1
        %s322 = smul.addr %s321, 32
        %s323 = scalar_lea.vmem [#allocation10], %s322
        %s324 = sld [smem:[#allocation2]]
        %v325 = vld [vmem:[%s270] sm:$0xff]
        %v326 = vstv %s324
        %v327 = vmul.f32 %v325, %v326
        %328 = vst [vmem:[%s323] sm:$0xff] %v327
        %s329 = sld [smem:[#allocation2 + $0x1]]
        %v330 = vld [vmem:[%s279] sm:$0xff]
        %v331 = vld [vmem:[%s279 + $0x8] sm:$0xff]
        %v332 = vstv %s329
        %v333 = vmul.f32 %v330, %v332
        %v334 = vmul.f32 %v331, %v332
        %335 = vst [vmem:[%s323 + $0x8] sm:$0xff] %v333
        %336 = vst [vmem:[%s323 + $0x10] sm:$0xff] %v334
        %s337 = sld [smem:[#allocation2 + $0x2]]
        %v338 = vld [vmem:[%s288] sm:$0xff]
        %v339 = vstv %s337
        %v340 = vmul.f32 %v338, %v339
        %341 = vst [vmem:[%s323 + $0x18] sm:$0xff] %v340
        %s342 = sand.u32 %s152, 1
        %s343 = scalar_lea.sflag [#allocation4], %s342
        %s344 = sand.u32 %s152, 1
        %s345 = smul.addr %s344, 32
        %s346 = scalar_lea.vmem [#allocation10], %s345
        // Predicated region
        $region53: #{tpu_custom_call.1} parent=35 // pred_check
          %p347 = pneg %p162
        $region54: #{tpu_custom_call.1} parent=35 // pred_check_branch
          %349 = sbr.rel (%p347) target = $region56
        $region55: #{tpu_custom_call.1} parent=35 // pred_region
          %s351 = ssub.s32 512, 512
          %352 = vsyncadd %s343, %s351
          %s353 = smul.addr %s29, 8
          %s354 = sadd.s32 %s30, %s353
          %s355 = smul.addr %s354, 128
          %s356 = scalar_lea.hbm %s4, %s355
          %s357 = sshll.u32 %s346, 4
          %s358 = int_to_ptr.vmem [resolvable:$true] %s357
          %363 = dma.vmem_to_hbm [thread:$0]  %s358, 512, %s356, %s343, 128, 256, 8
        $region56: #{tpu_custom_call.1} parent=35 // pred_fallthru
          _
      $region36: #{tpu_custom_call.1} parent=5 // pred_fallthru
        _
      %p364 = scmp.le.s32.totalorder 2, %s20
      // Predicated region
      $region57: #{tpu_custom_call.1} parent=5 // pred_check
        %p365 = pneg %p364
      $region58: #{tpu_custom_call.1} parent=5 // pred_check_branch
        %367 = sbr.rel (%p365) target = $region60
      $region59: #{tpu_custom_call.1} parent=5 // pred_region
        %s368 = ssub.s32 %s20, 2
        // Predicated region
        $region61: #{tpu_custom_call.1} parent=59 // pred_check
          %p369 = pneg %p168
        $region62: #{tpu_custom_call.1} parent=59 // pred_check_branch
          %371 = sbr.rel (%p369) target = $region64
        $region63: #{tpu_custom_call.1} parent=59 // pred_region
          %s372 = sand.u32 %s153, 1
          %s373 = scalar_lea.sflag [#allocation4], %s372
          %s374 = sand.u32 %s153, 1
          %s375 = smul.addr %s374, 32
          %s376 = scalar_lea.vmem [#allocation10], %s375
          %377 = dma.done %s373, 512
        $region64: #{tpu_custom_call.1} parent=59 // pred_fallthru
          _
      $region60: #{tpu_custom_call.1} parent=5 // pred_fallthru
        _
    $region6: #{tpu_custom_call.1} parent=1 // loop_footer
      %s24 = sadd.s32 1, %s20
    $region7: #{tpu_custom_call.1} parent=1 // loop_footer_branch
      %19 = sbr.rel target = $region3
    $region8: #{tpu_custom_call.1} parent=1 // loop_exit
      _
    %378 = vsyncpa [#allocation3], 1
    %s379 = scalar_lea.sflag [#allocation3], 1
    %380 = vsyncpa %s379, 1
    %381 = vsyncpa [#allocation8], 1
    %s382 = scalar_lea.sflag [#allocation8], 1
    %383 = vsyncpa %s382, 1
    %384 = vsyncpa [#allocation4], 1
    %s385 = scalar_lea.sflag [#allocation4], 1
    %386 = vsyncpa %s385, 1
    %387 = vsyncpa [#allocation5], 1
    %s388 = scalar_lea.sflag [#allocation5], 1
    %389 = vsyncpa %s388, 1

</llo_original>
